<compile_context>
chip_gen: v6e
topology: v6e:2x2x1
jax: 0.10.0
libtpu: 0.0.40
codegen_flags: <defaults>
</compile_context>

<pallas_src>
import functools

import jax
import jax.numpy as jnp
from jax import lax
from jax.experimental import pallas as pl
from jax.experimental.pallas import tpu as pltpu


# ------------------------------- kernels ------------------------------------

def _ccbn_train_kernel(x_ref, w_ref, b_ref, o_ref, mean_ref, var_ref, *,
                       eps, inv_count):
    """Batch-stats path; one channel slab per grid step.

    x_ref: (N, Ct, HW); w_ref/b_ref: (N, Ct, 1); mean_ref/var_ref: (1, Ct, 1).
    Single read of x: sum / sum-of-squares accumulation in f32, variance via
    E[x^2]-E[x]^2, mean folded into the shift -> one mul+add per element.
    """
    x = x_ref[...].astype(jnp.float32)                                # (N,Ct,HW)
    s1 = jnp.sum(jnp.sum(x, axis=2, keepdims=True), axis=0, keepdims=True)
    s2 = jnp.sum(jnp.sum(x * x, axis=2, keepdims=True), axis=0, keepdims=True)
    mean = s1 * inv_count                                             # (1,Ct,1)
    var = jnp.maximum(s2 * inv_count - mean * mean, 0.0)              # biased
    # TODO(synk): for data with |mean| >> std, mean-shift before the sum-of-
    # squares accumulation to avoid cancellation in E[x^2]-E[x]^2.
    inv = lax.rsqrt(var + eps)                                        # EUP slot
    scale = w_ref[...] * inv                                          # (N,Ct,1)
    shift = b_ref[...] - mean * scale                                 # (N,Ct,1)
    o_ref[...] = (x * scale + shift).astype(o_ref.dtype)              # lane-dense
    mean_ref[...] = mean
    var_ref[...] = var


def _ccbn_eval_kernel(x_ref, scale_ref, shift_ref, o_ref):
    """Running-stats path: pure per-(n,c) FMA (scale/shift folded in wrapper)."""
    o_ref[...] = (x_ref[...] * scale_ref[...] + shift_ref[...]).astype(o_ref.dtype)


# ------------------------------- wrapper -------------------------------------

def _pick_c_tile(N, C, HW, itemsize, slab_budget_bytes=32 * 1024 * 1024):
    """Largest channel slab (a multiple-of-8 divisor of C, or C itself) whose
    double-buffered in+out DMA footprint fits the VMEM budget."""
    per_channel = 4 * N * HW * itemsize            # 2 buffers x (in + out)
    max_c = max(1, slab_budget_bytes // max(per_channel, 1))
    if C <= max_c:
        return C
    cands = [d for d in range(8, C, 8) if C % d == 0]
    fitting = [d for d in cands if d <= max_c]
    if fitting:
        return max(fitting)
    if cands:
        # TODO(synk): fall back to a two-pass (stats, then normalize) pipeline
        # tiled over N*HW when even an 8-channel slab exceeds the VMEM budget.
        return min(cands)
    return C


def ccbn_forward(x, cats, weight, bias, running_mean, running_var, *,
                 eps=2e-5, momentum=0.1, affine=True, training=True,
                 track_running_stats=True):
    """Returns (out, new_running_mean, new_running_var)."""
    N, C, H, W = x.shape
    HW = H * W
    use_batch_stats = training or not track_running_stats

    if affine:
        w_sel = jnp.take(weight, cats, axis=0).astype(jnp.float32)    # (N, C)
        b_sel = jnp.take(bias, cats, axis=0).astype(jnp.float32)
    else:
        w_sel = jnp.ones((N, C), jnp.float32)
        b_sel = jnp.zeros((N, C), jnp.float32)

    x3 = x.reshape(N, C, HW)                       # free view, no transpose
    c_tile = _pick_c_tile(N, C, HW, x.dtype.itemsize)
    grid = (pl.cdiv(C, c_tile),)                   # c_tile always divides C

    x_spec = pl.BlockSpec((N, c_tile, HW), lambda c: (0, c, 0))
    nc1_spec = pl.BlockSpec((N, c_tile, 1), lambda c: (0, c, 0))
    stat_spec = pl.BlockSpec((1, c_tile, 1), lambda c: (0, c, 0))

    compiler_params = pltpu.CompilerParams(
        dimension_semantics=("parallel",),          # 2 TCs on v7x; no-op on v5e/v6e
        vmem_limit_bytes=48 * 1024 * 1024)
    cost = pl.CostEstimate(
        flops=5 * N * C * HW,
        transcendentals=C,
        bytes_accessed=2 * N * C * HW * x.dtype.itemsize)

    if use_batch_stats:
        out3, bmean, bvar = pl.pallas_call(
            functools.partial(_ccbn_train_kernel, eps=float(eps),
                              inv_count=1.0 / float(N * HW)),
            grid=grid,
            in_specs=[x_spec, nc1_spec, nc1_spec],
            out_specs=(x_spec, stat_spec, stat_spec),
            out_shape=(
                jax.ShapeDtypeStruct((N, C, HW), x.dtype),
                jax.ShapeDtypeStruct((1, C, 1), jnp.float32),
                jax.ShapeDtypeStruct((1, C, 1), jnp.float32),
            ),
            compiler_params=compiler_params,
            cost_estimate=cost,
        )(x3, w_sel.reshape(N, C, 1), b_sel.reshape(N, C, 1))
        out = out3.reshape(N, C, H, W)

        if training and track_running_stats:
            # TODO(synk): momentum=None (cumulative moving average via
            # num_batches_tracked) is not implemented; float momentum assumed.
            count = N * HW
            correction = count / (count - 1) if count > 1 else 1.0
            bmean1 = bmean.reshape(C)
            bvar1 = bvar.reshape(C)
            new_rm = (1.0 - momentum) * running_mean + momentum * bmean1
            new_rv = (1.0 - momentum) * running_var + momentum * bvar1 * correction
        else:
            new_rm, new_rv = running_mean, running_var
        return out, new_rm, new_rv

    # ---- eval path: fold running stats into per-(n,c) scale/shift, pure FMA ----
    inv = lax.rsqrt(running_var.astype(jnp.float32) + eps)            # (C,)
    scale = w_sel * inv[None, :]                                      # (N, C)
    shift = b_sel - running_mean.astype(jnp.float32)[None, :] * scale
    out3 = pl.pallas_call(
        _ccbn_eval_kernel,
        grid=grid,
        in_specs=[x_spec, nc1_spec, nc1_spec],
        out_specs=x_spec,
        out_shape=jax.ShapeDtypeStruct((N, C, HW), x.dtype),
        compiler_params=compiler_params,
        cost_estimate=cost,
    )(x3, scale.reshape(N, C, 1), shift.reshape(N, C, 1))
    return out3.reshape(N, C, H, W), running_mean, running_var


# ---------------------------- pure-JAX reference ----------------------------

def ccbn_reference(x, cats, weight, bias, running_mean, running_var, *,
                   eps=2e-5, momentum=0.1, training=True):
    if training:
        mean = x.mean(axis=(0, 2, 3))
        xm = x - mean[None, :, None, None]
        var = (xm * xm).mean(axis=(0, 2, 3))                          # biased
        count = x.shape[0] * x.shape[2] * x.shape[3]
        new_rm = (1.0 - momentum) * running_mean + momentum * mean
        new_rv = (1.0 - momentum) * running_var + momentum * var * count / (count - 1)
    else:
        mean, var = running_mean, running_var
        new_rm, new_rv = running_mean, running_var
    out = (x - mean[None, :, None, None]) / jnp.sqrt(var[None, :, None, None] + eps)
    w = weight[cats][:, :, None, None]
    b = bias[cats][:, :, None, None]
    return out * w + b, new_rm, new_rv


if __name__ == "__main__":
    N, C, H, W = 2, 4, 16, 16
    num_cats = 10
    eps, momentum = 2e-5, 0.1

    key = jax.random.PRNGKey(0)
    kx, kc, kw_, kb, km = jax.random.split(key, 5)
    x = jax.random.normal(kx, (N, C, H, W), dtype=jnp.float32)
    cats = jax.random.randint(kc, (N,), 0, num_cats)
    weight = 1.0 + 0.1 * jax.random.normal(kw_, (num_cats, C), jnp.float32)
    bias = 0.1 * jax.random.normal(kb, (num_cats, C), jnp.float32)
    running_mean = 0.05 * jax.random.normal(km, (C,), jnp.float32)
    running_var = 1.3 * jnp.ones((C,), jnp.float32)

    # --- training-mode forward (batch statistics + running-stat update) ---
    out_tr, rm_tr, rv_tr = ccbn_forward(
        x, cats, weight, bias, running_mean, running_var,
        eps=eps, momentum=momentum, training=True)
    out_tr = jax.block_until_ready(out_tr)
    ref_tr, ref_rm, ref_rv = ccbn_reference(
        x, cats, weight, bias, running_mean, running_var,
        eps=eps, momentum=momentum, training=True)

    assert out_tr.shape == (N, C, H, W)
    if not jnp.allclose(out_tr, ref_tr, rtol=1e-4, atol=1e-4):
        raise AssertionError("training-mode output mismatch vs JAX reference")
    if not (jnp.allclose(rm_tr, ref_rm, rtol=1e-5, atol=1e-5)
            and jnp.allclose(rv_tr, ref_rv, rtol=1e-5, atol=1e-5)):
        raise AssertionError("running-stat update mismatch vs JAX reference")

    # --- eval-mode forward (uses running statistics, no update) ---
    out_ev, _, _ = ccbn_forward(
        x, cats, weight, bias, running_mean, running_var,
        eps=eps, momentum=momentum, training=False)
    out_ev = jax.block_until_ready(out_ev)
    ref_ev, _, _ = ccbn_reference(
        x, cats, weight, bias, running_mean, running_var,
        eps=eps, momentum=momentum, training=False)
    if not jnp.allclose(out_ev, ref_ev, rtol=1e-4, atol=1e-4):
        raise AssertionError("eval-mode output mismatch vs JAX reference")

    print("KERNEL_OK")
</pallas_src>

<mosaic_0001>
module attributes {stable_mosaic.version = 11 : i64} {
  func.func @_ccbn_train_kernel(%arg0: i32, %arg1: memref<2x4x256xf32, #tpu.memory_space<vmem>>, %arg2: memref<2x4x1xf32, #tpu.memory_space<vmem>>, %arg3: memref<2x4x1xf32, #tpu.memory_space<vmem>>, %arg4: memref<2x4x256xf32, #tpu.memory_space<vmem>>, %arg5: memref<1x4x1xf32, #tpu.memory_space<vmem>>, %arg6: memref<1x4x1xf32, #tpu.memory_space<vmem>>) attributes {dimension_semantics = [#tpu.dimension_semantics<parallel>], iteration_bounds = array<i64: 1>, scalar_prefetch = 0 : i64, scratch_operands = 0 : i64, tpu.core_type = #tpu.core_type<tc>, window_params = [{transform_indices = @transform_0, window_bounds = array<i64: 2, 4, 256>}, {transform_indices = @transform_1, window_bounds = array<i64: 2, 4, 1>}, {transform_indices = @transform_2, window_bounds = array<i64: 2, 4, 1>}, {transform_indices = @transform_3, window_bounds = array<i64: 2, 4, 256>}, {transform_indices = @transform_4, window_bounds = array<i64: 1, 4, 1>}, {transform_indices = @transform_5, window_bounds = array<i64: 1, 4, 1>}]} {
    %c0 = arith.constant 0 : index
    %c0_0 = arith.constant 0 : index
    %c0_1 = arith.constant 0 : index
    %0 = vector.load %arg1[%c0, %c0_0, %c0_1] : memref<2x4x256xf32, #tpu.memory_space<vmem>>, vector<2x4x256xf32>
    %cst = arith.constant dense<0.000000e+00> : vector<2x4xf32>
    %1 = vector.multi_reduction <add>, %0, %cst [2] : vector<2x4x256xf32> to vector<2x4xf32>
    %2 = vector.shape_cast %1 : vector<2x4xf32> to vector<2x4x1xf32>
    %cst_2 = arith.constant dense<0.000000e+00> : vector<4x1xf32>
    %3 = vector.multi_reduction <add>, %2, %cst_2 [0] : vector<2x4x1xf32> to vector<4x1xf32>
    %4 = vector.shape_cast %3 : vector<4x1xf32> to vector<1x4x1xf32>
    %5 = arith.mulf %0, %0 : vector<2x4x256xf32>
    %cst_3 = arith.constant dense<0.000000e+00> : vector<2x4xf32>
    %6 = vector.multi_reduction <add>, %5, %cst_3 [2] : vector<2x4x256xf32> to vector<2x4xf32>
    %7 = vector.shape_cast %6 : vector<2x4xf32> to vector<2x4x1xf32>
    %cst_4 = arith.constant dense<0.000000e+00> : vector<4x1xf32>
    %8 = vector.multi_reduction <add>, %7, %cst_4 [0] : vector<2x4x1xf32> to vector<4x1xf32>
    %9 = vector.shape_cast %8 : vector<4x1xf32> to vector<1x4x1xf32>
    %cst_5 = arith.constant 0.001953125 : f32
    %10 = vector.broadcast %cst_5 : f32 to vector<1x4x1xf32>
    %11 = arith.mulf %4, %10 : vector<1x4x1xf32>
    %cst_6 = arith.constant 0.001953125 : f32
    %12 = vector.broadcast %cst_6 : f32 to vector<1x4x1xf32>
    %13 = arith.mulf %9, %12 : vector<1x4x1xf32>
    %14 = arith.mulf %11, %11 : vector<1x4x1xf32>
    %15 = arith.subf %13, %14 : vector<1x4x1xf32>
    %cst_7 = arith.constant 0.000000e+00 : f32
    %16 = vector.broadcast %cst_7 : f32 to vector<1x4x1xf32>
    %17 = arith.maximumf %15, %16 : vector<1x4x1xf32>
    %cst_8 = arith.constant 2.000000e-05 : f32
    %18 = vector.broadcast %cst_8 : f32 to vector<1x4x1xf32>
    %19 = arith.addf %17, %18 : vector<1x4x1xf32>
    %20 = math.rsqrt %19 : vector<1x4x1xf32>
    %c0_9 = arith.constant 0 : index
    %c0_10 = arith.constant 0 : index
    %c0_11 = arith.constant 0 : index
    %21 = vector.load %arg2[%c0_9, %c0_10, %c0_11] : memref<2x4x1xf32, #tpu.memory_space<vmem>>, vector<2x4x1xf32>
    %22 = vector.broadcast %20 : vector<1x4x1xf32> to vector<2x4x1xf32>
    %23 = arith.mulf %21, %22 : vector<2x4x1xf32>
    %c0_12 = arith.constant 0 : index
    %c0_13 = arith.constant 0 : index
    %c0_14 = arith.constant 0 : index
    %24 = vector.load %arg3[%c0_12, %c0_13, %c0_14] : memref<2x4x1xf32, #tpu.memory_space<vmem>>, vector<2x4x1xf32>
    %25 = vector.broadcast %11 : vector<1x4x1xf32> to vector<2x4x1xf32>
    %26 = arith.mulf %25, %23 : vector<2x4x1xf32>
    %27 = arith.subf %24, %26 : vector<2x4x1xf32>
    %28 = vector.broadcast %23 : vector<2x4x1xf32> to vector<2x4x256xf32>
    %29 = arith.mulf %0, %28 : vector<2x4x256xf32>
    %30 = vector.broadcast %27 : vector<2x4x1xf32> to vector<2x4x256xf32>
    %31 = arith.addf %29, %30 : vector<2x4x256xf32>
    %c0_15 = arith.constant 0 : index
    %c0_16 = arith.constant 0 : index
    %c0_17 = arith.constant 0 : index
    %32 = vector.load %arg4[%c0_15, %c0_16, %c0_17] : memref<2x4x256xf32, #tpu.memory_space<vmem>>, vector<2x4x256xf32>
    tpu.vector_store %arg4[%c0_15, %c0_16, %c0_17], %31 {strides = array<i32>} : memref<2x4x256xf32, #tpu.memory_space<vmem>>, vector<2x4x256xf32>,
    %c0_18 = arith.constant 0 : index
    %c0_19 = arith.constant 0 : index
    %c0_20 = arith.constant 0 : index
    %33 = vector.load %arg5[%c0_18, %c0_19, %c0_20] : memref<1x4x1xf32, #tpu.memory_space<vmem>>, vector<1x4x1xf32>
    tpu.vector_store %arg5[%c0_18, %c0_19, %c0_20], %11 {strides = array<i32>} : memref<1x4x1xf32, #tpu.memory_space<vmem>>, vector<1x4x1xf32>,
    %c0_21 = arith.constant 0 : index
    %c0_22 = arith.constant 0 : index
    %c0_23 = arith.constant 0 : index
    %34 = vector.load %arg6[%c0_21, %c0_22, %c0_23] : memref<1x4x1xf32, #tpu.memory_space<vmem>>, vector<1x4x1xf32>
    tpu.vector_store %arg6[%c0_21, %c0_22, %c0_23], %17 {strides = array<i32>} : memref<1x4x1xf32, #tpu.memory_space<vmem>>, vector<1x4x1xf32>,
    return
  }
  func.func @transform_0(%arg0: i32) -> (i32, i32, i32) {
    %c0_i32 = arith.constant 0 : i32
    %c0_i32_0 = arith.constant 0 : i32
    %c0_i32_1 = arith.constant 0 : i32
    return %c0_i32, %arg0, %c0_i32_0 : i32, i32, i32
  }
  func.func @transform_1(%arg0: i32) -> (i32, i32, i32) {
    %c0_i32 = arith.constant 0 : i32
    %c0_i32_0 = arith.constant 0 : i32
    %c0_i32_1 = arith.constant 0 : i32
    return %c0_i32, %arg0, %c0_i32_0 : i32, i32, i32
  }
  func.func @transform_2(%arg0: i32) -> (i32, i32, i32) {
    %c0_i32 = arith.constant 0 : i32
    %c0_i32_0 = arith.constant 0 : i32
    %c0_i32_1 = arith.constant 0 : i32
    return %c0_i32, %arg0, %c0_i32_0 : i32, i32, i32
  }
  func.func @transform_3(%arg0: i32) -> (i32, i32, i32) {
    %c0_i32 = arith.constant 0 : i32
    %c0_i32_0 = arith.constant 0 : i32
    %c0_i32_1 = arith.constant 0 : i32
    return %c0_i32, %arg0, %c0_i32_0 : i32, i32, i32
  }
  func.func @transform_4(%arg0: i32) -> (i32, i32, i32) {
    %c0_i32 = arith.constant 0 : i32
    %c0_i32_0 = arith.constant 0 : i32
    %c0_i32_1 = arith.constant 0 : i32
    return %c0_i32, %arg0, %c0_i32_0 : i32, i32, i32
  }
  func.func @transform_5(%arg0: i32) -> (i32, i32, i32) {
    %c0_i32 = arith.constant 0 : i32
    %c0_i32_0 = arith.constant 0 : i32
    %c0_i32_1 = arith.constant 0 : i32
    return %c0_i32, %arg0, %c0_i32_0 : i32, i32, i32
  }
}

</mosaic_0001>

<llo_original>
// kernel: tpu_custom_call.1
$region0: #{tpu_custom_call.1}
  #allocation0 [shape = 'u32[]', space=smem, size = 0x4, offset = 0x4, fixed_abs, tag = 'smem constant byte address 0x4 - core index']
  #allocation1 [shape = 'u32[144,128]{1,0:T(1,128)}', space=vmem, size = 0x12000, scoped, tag = 'internal scratch']
  %s0 = inlined_call_operand.vmem [shape: f32[2,4,256], index: 0, kind: input, shape index: {}]
  %s1 = inlined_call_operand.vmem [shape: f32[2,4,1], index: 1, kind: input, shape index: {}]
  %s2 = inlined_call_operand.vmem [shape: f32[2,4,1], index: 2, kind: input, shape index: {}]
  %s3 = inlined_call_operand.hbm [shape: f32[2,4,256], index: 3, kind: output, shape index: {0}]
  %s4 = inlined_call_operand.vmem [shape: f32[1,4,1], index: 4, kind: output, shape index: {1}]
  %s5 = inlined_call_operand.vmem [shape: f32[1,4,1], index: 5, kind: output, shape index: {2}]
  %6 = xla_tuple %s3, %s4, %s5
  %s7 = sld [smem:[#allocation0]]
  $region38: #{tpu_custom_call.1} parent=0
    _
  %s9 = ssub.s32 1, %s7
  %s10 = scalar_select 0, %s9, %s7
  $region1: #{tpu_custom_call.1} parent=0
    #allocation2 [shape = 'u8[8192]{0}', space=vmem, size = 0x2000, scoped, tag = 'output window, operand 0, single buffered']
    #allocation3 [shape = 's32[1]{0}', space=sflag, size = 0x4, scoped, tag = 'scoped memory for tpu_custom_call.1']
    %11 = vsyncpa [#allocation3], 0
    // Predicated region
    $region2: #{tpu_custom_call.1} parent=1 // pred_check
      _
    $region3: #{tpu_custom_call.1} parent=1 // pred_check_branch
      %13 = sbr.rel (0) target = $region5
    $region4: #{tpu_custom_call.1} parent=1 // pred_region
      _
    $region5: #{tpu_custom_call.1} parent=1 // pred_fallthru
      _
    // Predicated region
    $region6: #{tpu_custom_call.1} parent=1 // pred_check
      _
    $region7: #{tpu_custom_call.1} parent=1 // pred_check_branch
      %15 = sbr.rel (0) target = $region9
    $region8: #{tpu_custom_call.1} parent=1 // pred_region
      _
    $region9: #{tpu_custom_call.1} parent=1 // pred_fallthru
      _
    // Predicated region
    $region10: #{tpu_custom_call.1} parent=1 // pred_check
      _
    $region11: #{tpu_custom_call.1} parent=1 // pred_check_branch
      %17 = sbr.rel (0) target = $region13
    $region12: #{tpu_custom_call.1} parent=1 // pred_region
      _
    $region13: #{tpu_custom_call.1} parent=1 // pred_fallthru
      _
    %v18 = vld [vmem:[%s0] sm:$0xff]
    %v19 = vld [vmem:[%s0 + $0x8] sm:$0xff]
    %v22 = vcombine.high %v18, %v18
    %v23 = vcombine.high %v19, %v19
    %vm26 = vcmask 1043456
    %v27 = vsel %vm26, %v18, 0.0
    %v28 = vsel %vm26, %v22, 0.0
    %v29 = vadd.f32 %v27, %v28
    %30 = vadd.xlane.f32.xlu0 %v29
    %v31 = vpop.xlane.xlu0 %30
    %v32 = vsel %vm26, %v19, 0.0
    %v33 = vsel %vm26, %v23, 0.0
    %v34 = vadd.f32 %v32, %v33
    %35 = vadd.xlane.f32.xlu0 %v34
    %v36 = vpop.xlane.xlu0 %35
    %v37 = vsel %vm26, %v31, 0.0
    %v38 = vsel %vm26, %v36, 0.0
    %v39 = vadd.f32 %v37, %v38
    %v40 = vmul.f32 %v18, %v18
    %v41 = vmul.f32 %v19, %v19
    %v44 = vcombine.high %v40, %v40
    %v45 = vcombine.high %v41, %v41
    %v48 = vsel %vm26, %v40, 0.0
    %v49 = vsel %vm26, %v44, 0.0
    %v50 = vadd.f32 %v48, %v49
    %51 = vadd.xlane.f32.xlu0 %v50
    %v52 = vpop.xlane.xlu0 %51
    %v53 = vsel %vm26, %v41, 0.0
    %v54 = vsel %vm26, %v45, 0.0
    %v55 = vadd.f32 %v53, %v54
    %56 = vadd.xlane.f32.xlu0 %v55
    %v57 = vpop.xlane.xlu0 %56
    %v58 = vsel %vm26, %v52, 0.0
    %v59 = vsel %vm26, %v57, 0.0
    %v60 = vadd.f32 %v58, %v59
    %v61 = vmul.f32 %v39, 0.001953125
    %v62 = vmul.f32 %v60, 0.001953125
    %v63 = vmul.f32 %v61, %v61
    %v64 = vsub.f32 %v62, %v63
    %v65 = vmax.f32 %v64, 0.0
    %v66 = vadd.f32 %v65, 2e-05
    %v67 = vrsqrt.pop %v66
    %v68 = vld [vmem:[%s1] sm:$0xf]
    %v69 = vld [vmem:[%s1 + $0x4] sm:$0xf]
    %v70 = vmul.f32 %v68, %v67
    %v71 = vmul.f32 %v69, %v67
    %v72 = vld [vmem:[%s2] sm:$0xf]
    %v73 = vld [vmem:[%s2 + $0x4] sm:$0xf]
    %v74 = vmul.f32 %v61, %v70
    %v75 = vmul.f32 %v61, %v71
    %v76 = vsub.f32 %v72, %v74
    %v77 = vsub.f32 %v73, %v75
    %79 = vset.pattern.permute.xlu0 0
    %80 = vperm.xlu0 %79, %v70
    %v81 = vpop.permute.xlu0 %80
    %83 = vset.pattern.permute.xlu0 0
    %84 = vperm.xlu0 %83, %v71
    %v85 = vpop.permute.xlu0 %84
    %v87 = vunpack.c.l.s4 839922192
    %v88 = vunpack.c.0.s8 %v87
    %v89 = vlaneseq
    %v90 = vshrl.u32 %v89, 7
    %v91 = vsub.s32 %v88, %v90
    %v92 = vrot.slane %v81, %v91
    %v94 = vunpack.c.l.s4 839922192
    %v95 = vunpack.c.0.s8 %v94
    %v96 = vlaneseq
    %v97 = vshrl.u32 %v96, 7
    %v98 = vsub.s32 %v95, %v97
    %v99 = vrot.slane %v85, %v98
    %v102 = vmul.f32 %v18, %v92
    %v103 = vmul.f32 %v19, %v99
    %105 = vset.pattern.permute.xlu0 0
    %106 = vperm.xlu0 %105, %v76
    %v107 = vpop.permute.xlu0 %106
    %109 = vset.pattern.permute.xlu0 0
    %110 = vperm.xlu0 %109, %v77
    %v111 = vpop.permute.xlu0 %110
    %v113 = vunpack.c.l.s4 839922192
    %v114 = vunpack.c.0.s8 %v113
    %v115 = vlaneseq
    %v116 = vshrl.u32 %v115, 7
    %v117 = vsub.s32 %v114, %v116
    %v118 = vrot.slane %v107, %v117
    %v120 = vunpack.c.l.s4 839922192
    %v121 = vunpack.c.0.s8 %v120
    %v122 = vlaneseq
    %v123 = vshrl.u32 %v122, 7
    %v124 = vsub.s32 %v121, %v123
    %v125 = vrot.slane %v111, %v124
    %v128 = vadd.f32 %v102, %v118
    %v129 = vadd.f32 %v103, %v125
    %130 = vst [vmem:[#allocation2] sm:$0xff] %v128
    %131 = vst [vmem:[#allocation2 + $0x8] sm:$0xff] %v129
    %vm132 = vcmask 3072
    %133 = vst.msk [vmem:[%s4] sm:$0xf] %vm132, %v61
    %134 = vst.msk [vmem:[%s5] sm:$0xf] %vm132, %v65
    // Predicated region
    $region14: #{tpu_custom_call.1} parent=1 // pred_check
      _
    $region15: #{tpu_custom_call.1} parent=1 // pred_check_branch
      %136 = sbr.rel (0) target = $region17
    $region16: #{tpu_custom_call.1} parent=1 // pred_region
      %s138 = ssub.s32 256, 256
      %139 = vsyncadd [#allocation3], %s138
      %s140 = sshll.u32 [#allocation2], 4
      %s141 = int_to_ptr.vmem [resolvable:$true] %s140
      %146 = dma.vmem_to_hbm [thread:$0]  %s141, 256, %s3, [#allocation3], 128, 128, 8
    $region17: #{tpu_custom_call.1} parent=1 // pred_fallthru
      _
    // Predicated region
    $region18: #{tpu_custom_call.1} parent=1 // pred_check
      _
    $region19: #{tpu_custom_call.1} parent=1 // pred_check_branch
      %148 = sbr.rel (0) target = $region21
    $region20: #{tpu_custom_call.1} parent=1 // pred_region
      _
    $region21: #{tpu_custom_call.1} parent=1 // pred_fallthru
      _
    // Predicated region
    $region22: #{tpu_custom_call.1} parent=1 // pred_check
      _
    $region23: #{tpu_custom_call.1} parent=1 // pred_check_branch
      %150 = sbr.rel (0) target = $region25
    $region24: #{tpu_custom_call.1} parent=1 // pred_region
      _
    $region25: #{tpu_custom_call.1} parent=1 // pred_fallthru
      _
    // Predicated region
    $region26: #{tpu_custom_call.1} parent=1 // pred_check
      _
    $region27: #{tpu_custom_call.1} parent=1 // pred_check_branch
      %152 = sbr.rel (0) target = $region29
    $region28: #{tpu_custom_call.1} parent=1 // pred_region
      %153 = dma.done [#allocation3], 256
    $region29: #{tpu_custom_call.1} parent=1 // pred_fallthru
      _
    // Predicated region
    $region30: #{tpu_custom_call.1} parent=1 // pred_check
      _
    $region31: #{tpu_custom_call.1} parent=1 // pred_check_branch
      %155 = sbr.rel (0) target = $region33
    $region32: #{tpu_custom_call.1} parent=1 // pred_region
      _
    $region33: #{tpu_custom_call.1} parent=1 // pred_fallthru
      _
    // Predicated region
    $region34: #{tpu_custom_call.1} parent=1 // pred_check
      _
    $region35: #{tpu_custom_call.1} parent=1 // pred_check_branch
      %157 = sbr.rel (0) target = $region37
    $region36: #{tpu_custom_call.1} parent=1 // pred_region
      _
    $region37: #{tpu_custom_call.1} parent=1 // pred_fallthru
      _
    %158 = vsyncpa [#allocation3], 1

</llo_original>
